<compile_context>
chip_gen: v7x
topology: tpu7x:2x2x1
jax: 0.10.0
libtpu: 0.0.40
codegen_flags: <defaults>
</compile_context>

<pallas_src>
import math
import jax
import jax.numpy as jnp
from jax import lax
from jax.experimental import pallas as pl
from jax.experimental.pallas import tpu as pltpu

INPUT_SIZE = 5
HIDDEN_SIZE = 20
NUM_LAYER = 4          # 5->20, 20->20, 20->20, 20->1

IN_PAD = 8             # input features padded to 8 lanes (not 128)
HID_PAD = 32           # hidden padded to 32 lanes
OUT_PAD = 8            # final out_features (1) padded to 8 sublanes
MAX_TILE_N = 1024      # rows per grid step
BATCH = 8


def mlp_kernel(x_ref, w1_ref, w2_ref, w3_ref, w4_ref, o_ref):
    """Whole MLP forward for one row tile; all four weights are VMEM-resident."""
    h = jnp.dot(x_ref[...], w1_ref[...], preferred_element_type=jnp.float32)
    h = jnp.maximum(h, 0.0).astype(jnp.bfloat16)
    h = jnp.dot(h, w2_ref[...], preferred_element_type=jnp.float32)
    h = jnp.maximum(h, 0.0).astype(jnp.bfloat16)
    h = jnp.dot(h, w3_ref[...], preferred_element_type=jnp.float32)
    h = jnp.maximum(h, 0.0).astype(jnp.bfloat16)
    # Final layer: w4 stored [out_pad, hid_pad]; contract the last dim of both so the
    # result is [out_pad, tile_n] -> batch on the lane axis (lane-dense output store).
    o_ref[...] = lax.dot_general(
        w4_ref[...], h,
        dimension_numbers=(((1,), (1,)), ((), ())),
        preferred_element_type=jnp.float32)


def _round_up(x, m):
    return -(-x // m) * m


def _kaiming_uniform(key, out_features, in_features):
    # Test.sample() applies init.kaiming_uniform_(w): a=0, fan_in, gain=sqrt(2)
    bound = math.sqrt(2.0) * math.sqrt(3.0 / in_features)
    return jax.random.uniform(
        key, (out_features, in_features), jnp.float32, minval=-bound, maxval=bound)


def _spectral_normalize(w):
    # TODO(synk): torch's spectral_norm keeps a persistent power-iteration u-vector
    # (1-step sigma estimate per forward); we use the exact largest singular value.
    sigma = jnp.linalg.norm(w, ord=2)
    return w / sigma


def make_params(key):
    """bf16 weights in minimal padded layout:
       w1:[IN_PAD,HID_PAD], w2/w3:[HID_PAD,HID_PAD] (stored [in,out]),
       w4:[OUT_PAD,HID_PAD] (stored [out,in] for the lane-dense final matmul)."""
    sizes = [(HIDDEN_SIZE, INPUT_SIZE),
             (HIDDEN_SIZE, HIDDEN_SIZE),
             (HIDDEN_SIZE, HIDDEN_SIZE),
             (1, HIDDEN_SIZE)]
    keys = jax.random.split(key, len(sizes))
    raw = [_spectral_normalize(_kaiming_uniform(k, o, i))
           for k, (o, i) in zip(keys, sizes)]

    def pad_in_out(w_oi, in_pad, out_pad):
        w = w_oi.T  # [in, out]
        p = jnp.zeros((in_pad, out_pad), jnp.float32)
        return p.at[:w.shape[0], :w.shape[1]].set(w).astype(jnp.bfloat16)

    def pad_out_in(w_oi, out_pad, in_pad):
        p = jnp.zeros((out_pad, in_pad), jnp.float32)
        return p.at[:w_oi.shape[0], :w_oi.shape[1]].set(w_oi).astype(jnp.bfloat16)

    return [pad_in_out(raw[0], IN_PAD, HID_PAD),
            pad_in_out(raw[1], HID_PAD, HID_PAD),
            pad_in_out(raw[2], HID_PAD, HID_PAD),
            pad_out_in(raw[3], OUT_PAD, HID_PAD)]


def mlp_forward(x, ws):
    """x: [N, INPUT_SIZE] float32 -> [N, 1] float32."""
    n = x.shape[0]
    tile_n = min(MAX_TILE_N, _round_up(max(n, 1), 128))
    n_pad = _round_up(n, tile_n)
    grid = (n_pad // tile_n,)

    xp = (jnp.zeros((n_pad, IN_PAD), jnp.bfloat16)
          .at[:n, :INPUT_SIZE].set(x.astype(jnp.bfloat16)))

    def w_spec(w):
        return pl.BlockSpec(w.shape, lambda i: (0, 0))

    out_t = pl.pallas_call(
        mlp_kernel,
        out_shape=jax.ShapeDtypeStruct((OUT_PAD, n_pad), jnp.float32),
        grid=grid,
        in_specs=[pl.BlockSpec((tile_n, IN_PAD), lambda i: (i, 0))]
                 + [w_spec(w) for w in ws],
        out_specs=pl.BlockSpec((OUT_PAD, tile_n), lambda i: (0, i)),
        compiler_params=pltpu.CompilerParams(
            dimension_semantics=("parallel",),
            vmem_limit_bytes=32 * 1024 * 1024),
    )(xp, *ws)
    return out_t[0, :n][:, None]


def mlp_reference(x, ws):
    """Same bf16/f32-accum math, plain XLA."""
    w1, w2, w3, w4_oi = ws
    n = x.shape[0]
    h = (jnp.zeros((n, IN_PAD), jnp.bfloat16)
         .at[:, :INPUT_SIZE].set(x.astype(jnp.bfloat16)))
    for w in (w1, w2, w3):
        h = jnp.dot(h, w, preferred_element_type=jnp.float32)
        h = jnp.maximum(h, 0.0).astype(jnp.bfloat16)
    out = jnp.dot(h, w4_oi.T, preferred_element_type=jnp.float32)
    return out[:, :1]


if __name__ == "__main__":
    key = jax.random.PRNGKey(0)
    k_w, k_x, k_x2 = jax.random.split(key, 3)
    ws = make_params(k_w)

    # Small case (typical module usage): batch=8, input_size=5.
    x = jax.random.normal(k_x, (BATCH, INPUT_SIZE), jnp.float32)
    out = mlp_forward(x, ws)
    jax.block_until_ready(out)
    ref = mlp_reference(x, ws)
    assert out.shape == (BATCH, 1)
    assert jnp.allclose(out, ref, atol=1e-3, rtol=1e-3)

    # Larger batch to exercise the multi-tile "parallel" row grid.
    x2 = jax.random.normal(k_x2, (2500, INPUT_SIZE), jnp.float32)
    out2 = mlp_forward(x2, ws)
    jax.block_until_ready(out2)
    ref2 = mlp_reference(x2, ws)
    assert out2.shape == (2500, 1)
    assert jnp.allclose(out2, ref2, atol=1e-3, rtol=1e-3)

    print("KERNEL_OK")
</pallas_src>

<mosaic_0001>
module attributes {stable_mosaic.version = 11 : i64} {
  func.func @mlp_kernel(%arg0: i32, %arg1: memref<128x8xbf16, #tpu.memory_space<vmem>>, %arg2: memref<8x32xbf16, #tpu.memory_space<vmem>>, %arg3: memref<32x32xbf16, #tpu.memory_space<vmem>>, %arg4: memref<32x32xbf16, #tpu.memory_space<vmem>>, %arg5: memref<8x32xbf16, #tpu.memory_space<vmem>>, %arg6: memref<8x128xf32, #tpu.memory_space<vmem>>) attributes {dimension_semantics = [#tpu.dimension_semantics<parallel>], iteration_bounds = array<i64: 1>, scalar_prefetch = 0 : i64, scratch_operands = 0 : i64, tpu.core_type = #tpu.core_type<tc>, window_params = [{transform_indices = @transform_0, window_bounds = array<i64: 128, 8>}, {pipeline_mode = #tpu.pipeline_mode<synchronous>, transform_indices = @transform_1, window_bounds = array<i64: 8, 32>}, {pipeline_mode = #tpu.pipeline_mode<synchronous>, transform_indices = @transform_2, window_bounds = array<i64: 32, 32>}, {pipeline_mode = #tpu.pipeline_mode<synchronous>, transform_indices = @transform_3, window_bounds = array<i64: 32, 32>}, {pipeline_mode = #tpu.pipeline_mode<synchronous>, transform_indices = @transform_4, window_bounds = array<i64: 8, 32>}, {transform_indices = @transform_5, window_bounds = array<i64: 8, 128>}]} {
    %c0 = arith.constant 0 : index
    %c0_0 = arith.constant 0 : index
    %0 = vector.load %arg1[%c0, %c0_0] : memref<128x8xbf16, #tpu.memory_space<vmem>>, vector<128x8xbf16>
    %c0_1 = arith.constant 0 : index
    %c0_2 = arith.constant 0 : index
    %1 = vector.load %arg2[%c0_1, %c0_2] : memref<8x32xbf16, #tpu.memory_space<vmem>>, vector<8x32xbf16>
    %cst = arith.constant dense<0.000000e+00> : vector<128x32xf32>
    %2 = tpu.matmul %0, %1, %cst {dimension_numbers = #tpu.dot_dimension_numbers<[1], [0], [0], [1], [0, 0, 1, 1], [], []>} : vector<128x8xbf16>, vector<8x32xbf16>, vector<128x32xf32> -> vector<128x32xf32>
    %cst_3 = arith.constant 0.000000e+00 : f32
    %3 = vector.broadcast %cst_3 : f32 to vector<128x32xf32>
    %4 = arith.maximumf %2, %3 : vector<128x32xf32>
    %5 = arith.truncf %4 : vector<128x32xf32> to vector<128x32xbf16>
    %c0_4 = arith.constant 0 : index
    %c0_5 = arith.constant 0 : index
    %6 = vector.load %arg3[%c0_4, %c0_5] : memref<32x32xbf16, #tpu.memory_space<vmem>>, vector<32x32xbf16>
    %cst_6 = arith.constant dense<0.000000e+00> : vector<128x32xf32>
    %7 = tpu.matmul %5, %6, %cst_6 {dimension_numbers = #tpu.dot_dimension_numbers<[1], [0], [0], [1], [0, 0, 1, 1], [], []>} : vector<128x32xbf16>, vector<32x32xbf16>, vector<128x32xf32> -> vector<128x32xf32>
    %cst_7 = arith.constant 0.000000e+00 : f32
    %8 = vector.broadcast %cst_7 : f32 to vector<128x32xf32>
    %9 = arith.maximumf %7, %8 : vector<128x32xf32>
    %10 = arith.truncf %9 : vector<128x32xf32> to vector<128x32xbf16>
    %c0_8 = arith.constant 0 : index
    %c0_9 = arith.constant 0 : index
    %11 = vector.load %arg4[%c0_8, %c0_9] : memref<32x32xbf16, #tpu.memory_space<vmem>>, vector<32x32xbf16>
    %cst_10 = arith.constant dense<0.000000e+00> : vector<128x32xf32>
    %12 = tpu.matmul %10, %11, %cst_10 {dimension_numbers = #tpu.dot_dimension_numbers<[1], [0], [0], [1], [0, 0, 1, 1], [], []>} : vector<128x32xbf16>, vector<32x32xbf16>, vector<128x32xf32> -> vector<128x32xf32>
    %cst_11 = arith.constant 0.000000e+00 : f32
    %13 = vector.broadcast %cst_11 : f32 to vector<128x32xf32>
    %14 = arith.maximumf %12, %13 : vector<128x32xf32>
    %15 = arith.truncf %14 : vector<128x32xf32> to vector<128x32xbf16>
    %c0_12 = arith.constant 0 : index
    %c0_13 = arith.constant 0 : index
    %16 = vector.load %arg5[%c0_12, %c0_13] : memref<8x32xbf16, #tpu.memory_space<vmem>>, vector<8x32xbf16>
    %cst_14 = arith.constant dense<0.000000e+00> : vector<8x128xf32>
    %17 = tpu.matmul %16, %15, %cst_14 {dimension_numbers = #tpu.dot_dimension_numbers<[1], [1], [0], [0], [0, 0, 1, 0], [], []>} : vector<8x32xbf16>, vector<128x32xbf16>, vector<8x128xf32> -> vector<8x128xf32>
    %c0_15 = arith.constant 0 : index
    %c0_16 = arith.constant 0 : index
    %18 = vector.load %arg6[%c0_15, %c0_16] : memref<8x128xf32, #tpu.memory_space<vmem>>, vector<8x128xf32>
    tpu.vector_store %arg6[%c0_15, %c0_16], %17 {strides = array<i32>} : memref<8x128xf32, #tpu.memory_space<vmem>>, vector<8x128xf32>,
    return
  }
  func.func @transform_0(%arg0: i32) -> (i32, i32) {
    %c0_i32 = arith.constant 0 : i32
    %c0_i32_0 = arith.constant 0 : i32
    return %arg0, %c0_i32 : i32, i32
  }
  func.func @transform_1(%arg0: i32) -> (i32, i32) {
    %c0_i32 = arith.constant 0 : i32
    %c0_i32_0 = arith.constant 0 : i32
    %c0_i32_1 = arith.constant 0 : i32
    return %c0_i32, %c0_i32_0 : i32, i32
  }
  func.func @transform_2(%arg0: i32) -> (i32, i32) {
    %c0_i32 = arith.constant 0 : i32
    %c0_i32_0 = arith.constant 0 : i32
    %c0_i32_1 = arith.constant 0 : i32
    return %c0_i32, %c0_i32_0 : i32, i32
  }
  func.func @transform_3(%arg0: i32) -> (i32, i32) {
    %c0_i32 = arith.constant 0 : i32
    %c0_i32_0 = arith.constant 0 : i32
    %c0_i32_1 = arith.constant 0 : i32
    return %c0_i32, %c0_i32_0 : i32, i32
  }
  func.func @transform_4(%arg0: i32) -> (i32, i32) {
    %c0_i32 = arith.constant 0 : i32
    %c0_i32_0 = arith.constant 0 : i32
    %c0_i32_1 = arith.constant 0 : i32
    return %c0_i32, %c0_i32_0 : i32, i32
  }
  func.func @transform_5(%arg0: i32) -> (i32, i32) {
    %c0_i32 = arith.constant 0 : i32
    %c0_i32_0 = arith.constant 0 : i32
    return %c0_i32, %arg0 : i32, i32
  }
}

</mosaic_0001>

<llo_original>
// kernel: tpu_custom_call.1
$region0: #{tpu_custom_call.1}
  #allocation0 [shape = 'u32[]', space=smem, size = 0x4, offset = 0x4, fixed_abs, tag = 'smem constant byte address 0x4 - core index']
  #allocation1 [shape = 'u32[144,128]{1,0:T(1,128)}', space=vmem, size = 0x12000, scoped, tag = 'internal scratch']
  %s0 = inlined_call_operand.vmem [shape: bf16[128,8], index: 0, kind: input, shape index: {}]
  %s1 = inlined_call_operand.vmem [shape: bf16[8,32], index: 1, kind: input, shape index: {}]
  %s2 = inlined_call_operand.vmem [shape: bf16[32,32], index: 2, kind: input, shape index: {}]
  %s3 = inlined_call_operand.vmem [shape: bf16[32,32], index: 3, kind: input, shape index: {}]
  %s4 = inlined_call_operand.vmem [shape: bf16[8,32], index: 4, kind: input, shape index: {}]
  %s5 = inlined_call_operand.hbm [shape: f32[8,128], index: 5, kind: output, shape index: {}]
  %s6 = sld [smem:[#allocation0]]
  $region30: #{tpu_custom_call.1} parent=0
    _
  %s8 = ssub.s32 1, %s6
  %s9 = scalar_select 0, %s8, %s6
  $region1: #{tpu_custom_call.1} parent=0
    #allocation2 [shape = 'u8[4096]{0}', space=vmem, size = 0x1000, scoped, tag = 'output window, operand 0, single buffered']
    #allocation3 [shape = 's32[1]{0}', space=sflag, size = 0x4, scoped, tag = 'scoped memory for tpu_custom_call.1']
    %10 = vsyncpa [#allocation3], 0
    // Predicated region
    $region2: #{tpu_custom_call.1} parent=1 // pred_check
      _
    $region3: #{tpu_custom_call.1} parent=1 // pred_check_branch
      %12 = sbr.rel (0) target = $region5
    $region4: #{tpu_custom_call.1} parent=1 // pred_region
      _
    $region5: #{tpu_custom_call.1} parent=1 // pred_fallthru
      _
    // Predicated region
    $region6: #{tpu_custom_call.1} parent=1 // pred_check
      _
    $region7: #{tpu_custom_call.1} parent=1 // pred_check_branch
      %14 = sbr.rel (0) target = $region9
    $region8: #{tpu_custom_call.1} parent=1 // pred_region
      _
    $region9: #{tpu_custom_call.1} parent=1 // pred_fallthru
      _
    // Predicated region
    $region10: #{tpu_custom_call.1} parent=1 // pred_check
      _
    $region11: #{tpu_custom_call.1} parent=1 // pred_check_branch
      %16 = sbr.rel (0) target = $region13
    $region12: #{tpu_custom_call.1} parent=1 // pred_region
      _
    $region13: #{tpu_custom_call.1} parent=1 // pred_fallthru
      _
    // Predicated region
    $region14: #{tpu_custom_call.1} parent=1 // pred_check
      _
    $region15: #{tpu_custom_call.1} parent=1 // pred_check_branch
      %18 = sbr.rel (0) target = $region17
    $region16: #{tpu_custom_call.1} parent=1 // pred_region
      _
    $region17: #{tpu_custom_call.1} parent=1 // pred_fallthru
      _
    // Predicated region
    $region18: #{tpu_custom_call.1} parent=1 // pred_check
      _
    $region19: #{tpu_custom_call.1} parent=1 // pred_check_branch
      %20 = sbr.rel (0) target = $region21
    $region20: #{tpu_custom_call.1} parent=1 // pred_region
      _
    $region21: #{tpu_custom_call.1} parent=1 // pred_fallthru
      _
    %v22 = vld [vmem:[%s0] sm:$0xf]
    %v23 = vld [vmem:[%s0 + $0x4] sm:$0xf]
    %v24 = vld [vmem:[%s0 + $0x8] sm:$0xf]
    %v25 = vld [vmem:[%s0 + $0xc] sm:$0xf]
    %v26 = vld [vmem:[%s0 + $0x10] sm:$0xf]
    %v27 = vld [vmem:[%s0 + $0x14] sm:$0xf]
    %v28 = vld [vmem:[%s0 + $0x18] sm:$0xf]
    %v29 = vld [vmem:[%s0 + $0x1c] sm:$0xf]
    %v30 = vld [vmem:[%s0 + $0x20] sm:$0xf]
    %v31 = vld [vmem:[%s0 + $0x24] sm:$0xf]
    %v32 = vld [vmem:[%s0 + $0x28] sm:$0xf]
    %v33 = vld [vmem:[%s0 + $0x2c] sm:$0xf]
    %v34 = vld [vmem:[%s0 + $0x30] sm:$0xf]
    %v35 = vld [vmem:[%s0 + $0x34] sm:$0xf]
    %v36 = vld [vmem:[%s0 + $0x38] sm:$0xf]
    %v37 = vld [vmem:[%s0 + $0x3c] sm:$0xf]
    %v38 = vld [vmem:[%s1] sm:$0xf]
    %v55 = vunpack.c.l.b16 %v22
    %v56 = vunpack.c.l.b16 %v23
    %v57 = vunpack.c.l.b16 %v24
    %v58 = vunpack.c.l.b16 %v25
    %v59 = vunpack.c.l.b16 %v26
    %v60 = vunpack.c.l.b16 %v27
    %v61 = vunpack.c.l.b16 %v28
    %v62 = vunpack.c.l.b16 %v29
    %v63 = vunpack.c.l.b16 %v30
    %v64 = vunpack.c.l.b16 %v31
    %v65 = vunpack.c.l.b16 %v32
    %v66 = vunpack.c.l.b16 %v33
    %v67 = vunpack.c.l.b16 %v34
    %v68 = vunpack.c.l.b16 %v35
    %v69 = vunpack.c.l.b16 %v36
    %v70 = vunpack.c.l.b16 %v37
    %v71 = vpack.c.b16 %v56, %v55
    %v72 = vpack.c.b16 %v58, %v57
    %v73 = vpack.c.b16 %v60, %v59
    %v74 = vpack.c.b16 %v62, %v61
    %v75 = vpack.c.b16 %v64, %v63
    %v76 = vpack.c.b16 %v66, %v65
    %v77 = vpack.c.b16 %v68, %v67
    %v78 = vpack.c.b16 %v70, %v69
    %vm79 = vcmask 64512
    %v81 = vsel %vm79, %v71, 0
    %v84 = vsel %vm79, %v72, 0
    %v87 = vsel %vm79, %v73, 0
    %v90 = vsel %vm79, %v74, 0
    %v93 = vsel %vm79, %v75, 0
    %v96 = vsel %vm79, %v76, 0
    %v99 = vsel %vm79, %v77, 0
    %v102 = vsel %vm79, %v78, 0
    %vm104 = vcmask 1043456
    %v106 = vsel %vm104, %v38, 0
    %108 = vmatprep.subr.bf16.mxu0 0
    %109 = vmatpush1.bf16.msra.mxu0 %v106
    %110 = vmatprep.subr.bf16.mxu0 0
    %111 = vmatpush1.bf16.msra.mxu0 0
    %112 = vmatprep.subr.bf16.mxu0 0
    %113 = vmatpush1.bf16.msra.mxu0 0
    %114 = vmatprep.subr.bf16.mxu0 0
    %115 = vmatpush1.bf16.msra.mxu0 0
    %116 = vmatprep.subr.bf16.mxu0 0
    %117 = vmatpush1.bf16.msra.mxu0 0
    %118 = vmatprep.subr.bf16.mxu0 0
    %119 = vmatpush1.bf16.msra.mxu0 0
    %120 = vmatprep.subr.bf16.mxu0 0
    %121 = vmatpush1.bf16.msra.mxu0 0
    %122 = vmatprep.subr.bf16.mxu0 0
    %123 = vmatpush1.bf16.msra.mxu0 0
    %124 = vmatprep.subr.bf16.mxu0 0
    %125 = vmatpush1.bf16.msra.mxu0 0
    %126 = vmatprep.subr.bf16.mxu0 0
    %127 = vmatpush1.bf16.msra.mxu0 0
    %128 = vmatprep.subr.bf16.mxu0 0
    %129 = vmatpush1.bf16.msra.mxu0 0
    %130 = vmatprep.subr.bf16.mxu0 0
    %131 = vmatpush1.bf16.msra.mxu0 0
    %132 = vmatprep.subr.bf16.mxu0 0
    %133 = vmatpush1.bf16.msra.mxu0 0
    %134 = vmatprep.subr.bf16.mxu0 0
    %135 = vmatpush1.bf16.msra.mxu0 0
    %136 = vmatprep.subr.bf16.mxu0 0
    %137 = vmatpush1.bf16.msra.mxu0 0
    %138 = vmatprep.subr.bf16.mxu0 0
    %139 = vmatpush1.bf16.msra.mxu0 0
    %140 = vmatprep.mubr.bf16.mxu0 0
    %141 = vmatmul.mubr.bf16.gmra.mrb[0].mxu0 %v81
    %v142 = vpop.f32.mrb[0].mxu0
    %v143 = vadd.f32 0.0, %v142
    %v144 = vpop.f32.mrb[0].mxu0
    %v145 = vpop.f32.mrb[0].mxu0
    %v146 = vadd.f32 0.0, %v145
    %v147 = vpop.f32.mrb[0].mxu0
    %148 = vmatprep.mubr.bf16.mxu0 0
    %149 = vmatmul.mubr.bf16.gmra.mrb[0].mxu0 %v84
    %v150 = vpop.f32.mrb[0].mxu0
    %v151 = vadd.f32 0.0, %v150
    %v152 = vpop.f32.mrb[0].mxu0
    %v153 = vpop.f32.mrb[0].mxu0
    %v154 = vadd.f32 0.0, %v153
    %v155 = vpop.f32.mrb[0].mxu0
    %156 = vmatprep.mubr.bf16.mxu0 0
    %157 = vmatmul.mubr.bf16.gmra.mrb[0].mxu0 %v87
    %v158 = vpop.f32.mrb[0].mxu0
    %v159 = vadd.f32 0.0, %v158
    %v160 = vpop.f32.mrb[0].mxu0
    %v161 = vpop.f32.mrb[0].mxu0
    %v162 = vadd.f32 0.0, %v161
    %v163 = vpop.f32.mrb[0].mxu0
    %164 = vmatprep.mubr.bf16.mxu0 0
    %165 = vmatmul.mubr.bf16.gmra.mrb[0].mxu0 %v90
    %v166 = vpop.f32.mrb[0].mxu0
    %v167 = vadd.f32 0.0, %v166
    %v168 = vpop.f32.mrb[0].mxu0
    %v169 = vpop.f32.mrb[0].mxu0
    %v170 = vadd.f32 0.0, %v169
    %v171 = vpop.f32.mrb[0].mxu0
    %172 = vmatprep.mubr.bf16.mxu0 0
    %173 = vmatmul.mubr.bf16.gmra.mrb[0].mxu0 %v93
    %v174 = vpop.f32.mrb[0].mxu0
    %v175 = vadd.f32 0.0, %v174
    %v176 = vpop.f32.mrb[0].mxu0
    %v177 = vpop.f32.mrb[0].mxu0
    %v178 = vadd.f32 0.0, %v177
    %v179 = vpop.f32.mrb[0].mxu0
    %180 = vmatprep.mubr.bf16.mxu0 0
    %181 = vmatmul.mubr.bf16.gmra.mrb[0].mxu0 %v96
    %v182 = vpop.f32.mrb[0].mxu0
    %v183 = vadd.f32 0.0, %v182
    %v184 = vpop.f32.mrb[0].mxu0
    %v185 = vpop.f32.mrb[0].mxu0
    %v186 = vadd.f32 0.0, %v185
    %v187 = vpop.f32.mrb[0].mxu0
    %188 = vmatprep.mubr.bf16.mxu0 0
    %189 = vmatmul.mubr.bf16.gmra.mrb[0].mxu0 %v99
    %v190 = vpop.f32.mrb[0].mxu0
    %v191 = vadd.f32 0.0, %v190
    %v192 = vpop.f32.mrb[0].mxu0
    %v193 = vpop.f32.mrb[0].mxu0
    %v194 = vadd.f32 0.0, %v193
    %v195 = vpop.f32.mrb[0].mxu0
    %196 = vmatprep.mubr.bf16.mxu0 0
    %197 = vmatmul.mubr.bf16.gmra.mrb[0].mxu0 %v102
    %v198 = vpop.f32.mrb[0].mxu0
    %v199 = vadd.f32 0.0, %v198
    %v200 = vpop.f32.mrb[0].mxu0
    %v201 = vpop.f32.mrb[0].mxu0
    %v202 = vadd.f32 0.0, %v201
    %v203 = vpop.f32.mrb[0].mxu0
    %204 = vdwg.mxu0
    %v205 = vmax.f32 %v143, 0.0
    %v206 = vmax.f32 %v146, 0.0
    %v207 = vmax.f32 %v151, 0.0
    %v208 = vmax.f32 %v154, 0.0
    %v209 = vmax.f32 %v159, 0.0
    %v210 = vmax.f32 %v162, 0.0
    %v211 = vmax.f32 %v167, 0.0
    %v212 = vmax.f32 %v170, 0.0
    %v213 = vmax.f32 %v175, 0.0
    %v214 = vmax.f32 %v178, 0.0
    %v215 = vmax.f32 %v183, 0.0
    %v216 = vmax.f32 %v186, 0.0
    %v217 = vmax.f32 %v191, 0.0
    %v218 = vmax.f32 %v194, 0.0
    %v219 = vmax.f32 %v199, 0.0
    %v220 = vmax.f32 %v202, 0.0
    %v221 = vpack.c.bf16 %v206, %v205
    %v222 = vpack.c.bf16 %v208, %v207
    %v223 = vpack.c.bf16 %v210, %v209
    %v224 = vpack.c.bf16 %v212, %v211
    %v225 = vpack.c.bf16 %v214, %v213
    %v226 = vpack.c.bf16 %v216, %v215
    %v227 = vpack.c.bf16 %v218, %v217
    %v228 = vpack.c.bf16 %v220, %v219
    %v229 = vld [vmem:[%s2] sm:$0xf]
    %v230 = vld [vmem:[%s2 + $0x4] sm:$0xf]
    %v231 = vld [vmem:[%s2 + $0x8] sm:$0xf]
    %v232 = vld [vmem:[%s2 + $0xc] sm:$0xf]
    %v237 = vunpack.c.l.b16 %v229
    %v238 = vunpack.c.l.b16 %v230
    %v239 = vunpack.c.l.b16 %v231
    %v240 = vunpack.c.l.b16 %v232
    %v241 = vpack.c.b16 %v238, %v237
    %v242 = vpack.c.b16 %v240, %v239
    %vm245 = vcmask 261120
    %v247 = vsel %vm245, %v221, 0
    %v250 = vsel %vm245, %v222, 0
    %v253 = vsel %vm245, %v223, 0
    %v256 = vsel %vm245, %v224, 0
    %v259 = vsel %vm245, %v225, 0
    %v262 = vsel %vm245, %v226, 0
    %v265 = vsel %vm245, %v227, 0
    %v268 = vsel %vm245, %v228, 0
    %270 = vmatprep.subr.bf16.mxu0 0
    %271 = vmatpush1.bf16.msra.mxu0 %v241
    %272 = vmatprep.subr.bf16.mxu0 0
    %273 = vmatpush1.bf16.msra.mxu0 %v242
    %274 = vmatprep.subr.bf16.mxu0 0
    %275 = vmatpush1.bf16.msra.mxu0 0
    %276 = vmatprep.subr.bf16.mxu0 0
    %277 = vmatpush1.bf16.msra.mxu0 0
    %278 = vmatprep.subr.bf16.mxu0 0
    %279 = vmatpush1.bf16.msra.mxu0 0
    %280 = vmatprep.subr.bf16.mxu0 0
    %281 = vmatpush1.bf16.msra.mxu0 0
    %282 = vmatprep.subr.bf16.mxu0 0
    %283 = vmatpush1.bf16.msra.mxu0 0
    %284 = vmatprep.subr.bf16.mxu0 0
    %285 = vmatpush1.bf16.msra.mxu0 0
    %286 = vmatprep.subr.bf16.mxu0 0
    %287 = vmatpush1.bf16.msra.mxu0 0
    %288 = vmatprep.subr.bf16.mxu0 0
    %289 = vmatpush1.bf16.msra.mxu0 0
    %290 = vmatprep.subr.bf16.mxu0 0
    %291 = vmatpush1.bf16.msra.mxu0 0
    %292 = vmatprep.subr.bf16.mxu0 0
    %293 = vmatpush1.bf16.msra.mxu0 0
    %294 = vmatprep.subr.bf16.mxu0 0
    %295 = vmatpush1.bf16.msra.mxu0 0
    %296 = vmatprep.subr.bf16.mxu0 0
    %297 = vmatpush1.bf16.msra.mxu0 0
    %298 = vmatprep.subr.bf16.mxu0 0
    %299 = vmatpush1.bf16.msra.mxu0 0
    %300 = vmatprep.subr.bf16.mxu0 0
    %301 = vmatpush1.bf16.msra.mxu0 0
    %302 = vmatprep.mubr.bf16.mxu0 0
    %303 = vmatmul.mubr.bf16.gmra.mrb[0].mxu0 %v247
    %v304 = vpop.f32.mrb[0].mxu0
    %v305 = vadd.f32 0.0, %v304
    %v306 = vpop.f32.mrb[0].mxu0
    %v307 = vpop.f32.mrb[0].mxu0
    %v308 = vadd.f32 0.0, %v307
    %v309 = vpop.f32.mrb[0].mxu0
    %310 = vmatprep.mubr.bf16.mxu0 0
    %311 = vmatmul.mubr.bf16.gmra.mrb[0].mxu0 %v250
    %v312 = vpop.f32.mrb[0].mxu0
    %v313 = vadd.f32 0.0, %v312
    %v314 = vpop.f32.mrb[0].mxu0
    %v315 = vpop.f32.mrb[0].mxu0
    %v316 = vadd.f32 0.0, %v315
    %v317 = vpop.f32.mrb[0].mxu0
    %318 = vmatprep.mubr.bf16.mxu0 0
    %319 = vmatmul.mubr.bf16.gmra.mrb[0].mxu0 %v253
    %v320 = vpop.f32.mrb[0].mxu0
    %v321 = vadd.f32 0.0, %v320
    %v322 = vpop.f32.mrb[0].mxu0
    %v323 = vpop.f32.mrb[0].mxu0
    %v324 = vadd.f32 0.0, %v323
    %v325 = vpop.f32.mrb[0].mxu0
    %326 = vmatprep.mubr.bf16.mxu0 0
    %327 = vmatmul.mubr.bf16.gmra.mrb[0].mxu0 %v256
    %v328 = vpop.f32.mrb[0].mxu0
    %v329 = vadd.f32 0.0, %v328
    %v330 = vpop.f32.mrb[0].mxu0
    %v331 = vpop.f32.mrb[0].mxu0
    %v332 = vadd.f32 0.0, %v331
    %v333 = vpop.f32.mrb[0].mxu0
    %334 = vmatprep.mubr.bf16.mxu0 0
    %335 = vmatmul.mubr.bf16.gmra.mrb[0].mxu0 %v259
    %v336 = vpop.f32.mrb[0].mxu0
    %v337 = vadd.f32 0.0, %v336
    %v338 = vpop.f32.mrb[0].mxu0
    %v339 = vpop.f32.mrb[0].mxu0
    %v340 = vadd.f32 0.0, %v339
    %v341 = vpop.f32.mrb[0].mxu0
    %342 = vmatprep.mubr.bf16.mxu0 0
    %343 = vmatmul.mubr.bf16.gmra.mrb[0].mxu0 %v262
    %v344 = vpop.f32.mrb[0].mxu0
    %v345 = vadd.f32 0.0, %v344
    %v346 = vpop.f32.mrb[0].mxu0
    %v347 = vpop.f32.mrb[0].mxu0
    %v348 = vadd.f32 0.0, %v347
    %v349 = vpop.f32.mrb[0].mxu0
    %350 = vmatprep.mubr.bf16.mxu0 0
    %351 = vmatmul.mubr.bf16.gmra.mrb[0].mxu0 %v265
    %v352 = vpop.f32.mrb[0].mxu0
    %v353 = vadd.f32 0.0, %v352
    %v354 = vpop.f32.mrb[0].mxu0
    %v355 = vpop.f32.mrb[0].mxu0
    %v356 = vadd.f32 0.0, %v355
    %v357 = vpop.f32.mrb[0].mxu0
    %358 = vmatprep.mubr.bf16.mxu0 0
    %359 = vmatmul.mubr.bf16.gmra.mrb[0].mxu0 %v268
    %v360 = vpop.f32.mrb[0].mxu0
    %v361 = vadd.f32 0.0, %v360
    %v362 = vpop.f32.mrb[0].mxu0
    %v363 = vpop.f32.mrb[0].mxu0
    %v364 = vadd.f32 0.0, %v363
    %v365 = vpop.f32.mrb[0].mxu0
    %366 = vdwg.mxu0
    %v367 = vmax.f32 %v305, 0.0
    %v368 = vmax.f32 %v308, 0.0
    %v369 = vmax.f32 %v313, 0.0
    %v370 = vmax.f32 %v316, 0.0
    %v371 = vmax.f32 %v321, 0.0
    %v372 = vmax.f32 %v324, 0.0
    %v373 = vmax.f32 %v329, 0.0
    %v374 = vmax.f32 %v332, 0.0
    %v375 = vmax.f32 %v337, 0.0
    %v376 = vmax.f32 %v340, 0.0
    %v377 = vmax.f32 %v345, 0.0
    %v378 = vmax.f32 %v348, 0.0
    %v379 = vmax.f32 %v353, 0.0
    %v380 = vmax.f32 %v356, 0.0
    %v381 = vmax.f32 %v361, 0.0
    %v382 = vmax.f32 %v364, 0.0
    %v383 = vpack.c.bf16 %v368, %v367
    %v384 = vpack.c.bf16 %v370, %v369
    %v385 = vpack.c.bf16 %v372, %v371
    %v386 = vpack.c.bf16 %v374, %v373
    %v387 = vpack.c.bf16 %v376, %v375
    %v388 = vpack.c.bf16 %v378, %v377
    %v389 = vpack.c.bf16 %v380, %v379
    %v390 = vpack.c.bf16 %v382, %v381
    %v391 = vld [vmem:[%s3] sm:$0xf]
    %v392 = vld [vmem:[%s3 + $0x4] sm:$0xf]
    %v393 = vld [vmem:[%s3 + $0x8] sm:$0xf]
    %v394 = vld [vmem:[%s3 + $0xc] sm:$0xf]
    %v399 = vunpack.c.l.b16 %v391
    %v400 = vunpack.c.l.b16 %v392
    %v401 = vunpack.c.l.b16 %v393
    %v402 = vunpack.c.l.b16 %v394
    %v403 = vpack.c.b16 %v400, %v399
    %v404 = vpack.c.b16 %v402, %v401
    %v408 = vsel %vm245, %v383, 0
    %v411 = vsel %vm245, %v384, 0
    %v414 = vsel %vm245, %v385, 0
    %v417 = vsel %vm245, %v386, 0
    %v420 = vsel %vm245, %v387, 0
    %v423 = vsel %vm245, %v388, 0
    %v426 = vsel %vm245, %v389, 0
    %v429 = vsel %vm245, %v390, 0
    %431 = vmatprep.subr.bf16.mxu0 0
    %432 = vmatpush1.bf16.msra.mxu0 %v403
    %433 = vmatprep.subr.bf16.mxu0 0
    %434 = vmatpush1.bf16.msra.mxu0 %v404
    %435 = vmatprep.subr.bf16.mxu0 0
    %436 = vmatpush1.bf16.msra.mxu0 0
    %437 = vmatprep.subr.bf16.mxu0 0
    %438 = vmatpush1.bf16.msra.mxu0 0
    %439 = vmatprep.subr.bf16.mxu0 0
    %440 = vmatpush1.bf16.msra.mxu0 0
    %441 = vmatprep.subr.bf16.mxu0 0
    %442 = vmatpush1.bf16.msra.mxu0 0
    %443 = vmatprep.subr.bf16.mxu0 0
    %444 = vmatpush1.bf16.msra.mxu0 0
    %445 = vmatprep.subr.bf16.mxu0 0
    %446 = vmatpush1.bf16.msra.mxu0 0
    %447 = vmatprep.subr.bf16.mxu0 0
    %448 = vmatpush1.bf16.msra.mxu0 0
    %449 = vmatprep.subr.bf16.mxu0 0
    %450 = vmatpush1.bf16.msra.mxu0 0
    %451 = vmatprep.subr.bf16.mxu0 0
    %452 = vmatpush1.bf16.msra.mxu0 0
    %453 = vmatprep.subr.bf16.mxu0 0
    %454 = vmatpush1.bf16.msra.mxu0 0
    %455 = vmatprep.subr.bf16.mxu0 0
    %456 = vmatpush1.bf16.msra.mxu0 0
    %457 = vmatprep.subr.bf16.mxu0 0
    %458 = vmatpush1.bf16.msra.mxu0 0
    %459 = vmatprep.subr.bf16.mxu0 0
    %460 = vmatpush1.bf16.msra.mxu0 0
    %461 = vmatprep.subr.bf16.mxu0 0
    %462 = vmatpush1.bf16.msra.mxu0 0
    %463 = vmatprep.mubr.bf16.mxu0 0
    %464 = vmatmul.mubr.bf16.gmra.mrb[0].mxu0 %v408
    %v465 = vpop.f32.mrb[0].mxu0
    %v466 = vadd.f32 0.0, %v465
    %v467 = vpop.f32.mrb[0].mxu0
    %v468 = vpop.f32.mrb[0].mxu0
    %v469 = vadd.f32 0.0, %v468
    %v470 = vpop.f32.mrb[0].mxu0
    %471 = vmatprep.mubr.bf16.mxu0 0
    %472 = vmatmul.mubr.bf16.gmra.mrb[0].mxu0 %v411
    %v473 = vpop.f32.mrb[0].mxu0
    %v474 = vadd.f32 0.0, %v473
    %v475 = vpop.f32.mrb[0].mxu0
    %v476 = vpop.f32.mrb[0].mxu0
    %v477 = vadd.f32 0.0, %v476
    %v478 = vpop.f32.mrb[0].mxu0
    %479 = vmatprep.mubr.bf16.mxu0 0
    %480 = vmatmul.mubr.bf16.gmra.mrb[0].mxu0 %v414
    %v481 = vpop.f32.mrb[0].mxu0
    %v482 = vadd.f32 0.0, %v481
    %v483 = vpop.f32.mrb[0].mxu0
    %v484 = vpop.f32.mrb[0].mxu0
    %v485 = vadd.f32 0.0, %v484
    %v486 = vpop.f32.mrb[0].mxu0
    %487 = vmatprep.mubr.bf16.mxu0 0
    %488 = vmatmul.mubr.bf16.gmra.mrb[0].mxu0 %v417
    %v489 = vpop.f32.mrb[0].mxu0
    %v490 = vadd.f32 0.0, %v489
    %v491 = vpop.f32.mrb[0].mxu0
    %v492 = vpop.f32.mrb[0].mxu0
    %v493 = vadd.f32 0.0, %v492
    %v494 = vpop.f32.mrb[0].mxu0
    %495 = vmatprep.mubr.bf16.mxu0 0
    %496 = vmatmul.mubr.bf16.gmra.mrb[0].mxu0 %v420
    %v497 = vpop.f32.mrb[0].mxu0
    %v498 = vadd.f32 0.0, %v497
    %v499 = vpop.f32.mrb[0].mxu0
    %v500 = vpop.f32.mrb[0].mxu0
    %v501 = vadd.f32 0.0, %v500
    %v502 = vpop.f32.mrb[0].mxu0
    %503 = vmatprep.mubr.bf16.mxu0 0
    %504 = vmatmul.mubr.bf16.gmra.mrb[0].mxu0 %v423
    %v505 = vpop.f32.mrb[0].mxu0
    %v506 = vadd.f32 0.0, %v505
    %v507 = vpop.f32.mrb[0].mxu0
    %v508 = vpop.f32.mrb[0].mxu0
    %v509 = vadd.f32 0.0, %v508
    %v510 = vpop.f32.mrb[0].mxu0
    %511 = vmatprep.mubr.bf16.mxu0 0
    %512 = vmatmul.mubr.bf16.gmra.mrb[0].mxu0 %v426
    %v513 = vpop.f32.mrb[0].mxu0
    %v514 = vadd.f32 0.0, %v513
    %v515 = vpop.f32.mrb[0].mxu0
    %v516 = vpop.f32.mrb[0].mxu0
    %v517 = vadd.f32 0.0, %v516
    %v518 = vpop.f32.mrb[0].mxu0
    %519 = vmatprep.mubr.bf16.mxu0 0
    %520 = vmatmul.mubr.bf16.gmra.mrb[0].mxu0 %v429
    %v521 = vpop.f32.mrb[0].mxu0
    %v522 = vadd.f32 0.0, %v521
    %v523 = vpop.f32.mrb[0].mxu0
    %v524 = vpop.f32.mrb[0].mxu0
    %v525 = vadd.f32 0.0, %v524
    %v526 = vpop.f32.mrb[0].mxu0
    %527 = vdwg.mxu0
    %v528 = vmax.f32 %v466, 0.0
    %v529 = vmax.f32 %v469, 0.0
    %v530 = vmax.f32 %v474, 0.0
    %v531 = vmax.f32 %v477, 0.0
    %v532 = vmax.f32 %v482, 0.0
    %v533 = vmax.f32 %v485, 0.0
    %v534 = vmax.f32 %v490, 0.0
    %v535 = vmax.f32 %v493, 0.0
    %v536 = vmax.f32 %v498, 0.0
    %v537 = vmax.f32 %v501, 0.0
    %v538 = vmax.f32 %v506, 0.0
    %v539 = vmax.f32 %v509, 0.0
    %v540 = vmax.f32 %v514, 0.0
    %v541 = vmax.f32 %v517, 0.0
    %v542 = vmax.f32 %v522, 0.0
    %v543 = vmax.f32 %v525, 0.0
    %v544 = vpack.c.bf16 %v529, %v528
    %v545 = vpack.c.bf16 %v531, %v530
    %v546 = vpack.c.bf16 %v533, %v532
    %v547 = vpack.c.bf16 %v535, %v534
    %v548 = vpack.c.bf16 %v537, %v536
    %v549 = vpack.c.bf16 %v539, %v538
    %v550 = vpack.c.bf16 %v541, %v540
    %v551 = vpack.c.bf16 %v543, %v542
    %v552 = vld [vmem:[%s4] sm:$0xf]
    %v554 = vsel %vm245, %v552, 0
    %v557 = vsel %vm245, %v544, 0
    %v560 = vsel %vm245, %v545, 0
    %v563 = vsel %vm245, %v546, 0
    %v566 = vsel %vm245, %v547, 0
    %v569 = vsel %vm245, %v548, 0
    %v572 = vsel %vm245, %v549, 0
    %v575 = vsel %vm245, %v550, 0
    %v578 = vsel %vm245, %v551, 0
    %580 = vmatprep.subr.bf16.mxu0 0
    %581 = vmatpush1.bf16.xpose.msra.mxu0 %v557
    %582 = vmatprep.subr.bf16.mxu0 0
    %583 = vmatpush1.bf16.xpose.msra.mxu0 %v560
    %584 = vmatprep.subr.bf16.mxu0 0
    %585 = vmatpush1.bf16.xpose.msra.mxu0 %v563
    %586 = vmatprep.subr.bf16.mxu0 0
    %587 = vmatpush1.bf16.xpose.msra.mxu0 %v566
    %588 = vmatprep.subr.bf16.mxu0 0
    %589 = vmatpush1.bf16.xpose.msra.mxu0 %v569
    %590 = vmatprep.subr.bf16.mxu0 0
    %591 = vmatpush1.bf16.xpose.msra.mxu0 %v572
    %592 = vmatprep.subr.bf16.mxu0 0
    %593 = vmatpush1.bf16.xpose.msra.mxu0 %v575
    %594 = vmatprep.subr.bf16.mxu0 0
    %595 = vmatpush1.bf16.xpose.msra.mxu0 %v578
    %596 = vmatprep.subr.bf16.mxu0 0
    %597 = vmatpush1.bf16.xpose.msra.mxu0 0
    %598 = vmatprep.subr.bf16.mxu0 0
    %599 = vmatpush1.bf16.xpose.msra.mxu0 0
    %600 = vmatprep.subr.bf16.mxu0 0
    %601 = vmatpush1.bf16.xpose.msra.mxu0 0
    %602 = vmatprep.subr.bf16.mxu0 0
    %603 = vmatpush1.bf16.xpose.msra.mxu0 0
    %604 = vmatprep.subr.bf16.mxu0 0
    %605 = vmatpush1.bf16.xpose.msra.mxu0 0
    %606 = vmatprep.subr.bf16.mxu0 0
    %607 = vmatpush1.bf16.xpose.msra.mxu0 0
    %608 = vmatprep.subr.bf16.mxu0 0
    %609 = vmatpush1.bf16.xpose.msra.mxu0 0
    %610 = vmatprep.subr.bf16.mxu0 0
    %611 = vmatpush1.bf16.xpose.msra.mxu0 0
    %612 = vmatprep.mubr.bf16.mxu0 0
    %613 = vmatmul.mubr.bf16.gmra.mrb[0].mxu0 %v554
    %v614 = vpop.f32.mrb[0].mxu0
    %v615 = vadd.f32 0.0, %v614
    %v616 = vpop.f32.mrb[0].mxu0
    %v617 = vpop.f32.mrb[0].mxu0
    %v618 = vpop.f32.mrb[0].mxu0
    %619 = vdwg.mxu0
    %620 = vst [vmem:[#allocation2] sm:$0xff] %v615
    // Predicated region
    $region22: #{tpu_custom_call.1} parent=1 // pred_check
      _
    $region23: #{tpu_custom_call.1} parent=1 // pred_check_branch
      %622 = sbr.rel (0) target = $region25
    $region24: #{tpu_custom_call.1} parent=1 // pred_region
      %s624 = ssub.s32 128, 128
      %625 = vsyncadd [#allocation3], %s624
      %s627 = sshll.u32 [#allocation2], 4
      %s628 = int_to_ptr.vmem [resolvable:$true] %s627
      %630 = dma.vmem_to_hbm [thread:$0]  %s628, 128, %s5, [#allocation3]
    $region25: #{tpu_custom_call.1} parent=1 // pred_fallthru
      _
    // Predicated region
    $region26: #{tpu_custom_call.1} parent=1 // pred_check
      _
    $region27: #{tpu_custom_call.1} parent=1 // pred_check_branch
      %632 = sbr.rel (0) target = $region29
    $region28: #{tpu_custom_call.1} parent=1 // pred_region
      %633 = dma.done [#allocation3], 128
    $region29: #{tpu_custom_call.1} parent=1 // pred_fallthru
      _
    %634 = vsyncpa [#allocation3], 1

</llo_original>
